<compile_context>
chip_gen: v5e
topology: v5e:2x2
jax: 0.10.0
libtpu: 0.0.40
codegen_flags: <defaults>
</compile_context>

<pallas_src>
import functools

import jax
import jax.numpy as jnp
from jax.experimental import pallas as pl
from jax.experimental.pallas import tpu as pltpu


# Batch size at/above which we force >= 2 grid steps so the "parallel" grid
# axis can shard across v7x's two TensorCores (no-op on single-TC v5e/v6e).
_MIN_B_FOR_TC_SPLIT = 2048


def _encoder_kernel(x_ref, w1_ref, b1_ref, w2_ref, b2_ref, w3_ref, b3_ref, o_ref):
    # x_ref:  (TB, in_size)          (input dtype: bf16 preferred, f32 ok)
    # w1_ref: (in_size, h1) bf16/f32   b1_ref: (1, h1)     f32
    # w2_ref: (h1, h2)      bf16/f32   b2_ref: (1, h2)     f32
    # w3_ref: (h2, latent)  bf16/f32   b3_ref: (1, latent) f32
    # o_ref:  (TB, latent)
    compute_dtype = w1_ref.dtype

    # Cast activations to the weight (MXU compute) dtype on the VPU; all
    # matmuls accumulate in f32; bias add + ReLU stay in f32 (v5e-friendly).
    x = x_ref[...].astype(compute_dtype)

    h1 = jnp.dot(x, w1_ref[...], preferred_element_type=jnp.float32) + b1_ref[...]
    h1 = jnp.maximum(h1, 0.0).astype(compute_dtype)

    h2 = jnp.dot(h1, w2_ref[...], preferred_element_type=jnp.float32) + b2_ref[...]
    h2 = jnp.maximum(h2, 0.0).astype(compute_dtype)

    z = jnp.dot(h2, w3_ref[...], preferred_element_type=jnp.float32) + b3_ref[...]
    z = jnp.maximum(z, 0.0)

    # NOTE: on a partial final tile the padded rows carry garbage through the
    # math; they are clipped on store, so this is harmless outside debug runs.
    o_ref[...] = z.astype(o_ref.dtype)


def prepare_params(params, compute_dtype=jnp.bfloat16):
    """One-time glue, hoisted out of the per-call path.

    Takes PyTorch-convention params (W: (out_features, in_features), b: (out,))
    and returns weights transposed to (in, out) in `compute_dtype` plus biases
    lifted to (1, out) in f32.

    compute_dtype=jnp.bfloat16 is the production default (native MXU mode);
    compute_dtype=jnp.float32 is a parity-test-only path (MXU emulation,
    doubles weight/x VMEM and bytes).
    """
    return {
        "w1t": jnp.asarray(params["w1"]).T.astype(compute_dtype),
        "w2t": jnp.asarray(params["w2"]).T.astype(compute_dtype),
        "w3t": jnp.asarray(params["w3"]).T.astype(compute_dtype),
        "b1": jnp.asarray(params["b1"]).reshape(1, -1).astype(jnp.float32),
        "b2": jnp.asarray(params["b2"]).reshape(1, -1).astype(jnp.float32),
        "b3": jnp.asarray(params["b3"]).reshape(1, -1).astype(jnp.float32),
    }


def _pick_batch_tile(B, block_b):
    """Choose the batch tile: big, (8,128)-legal, and >=2 grid steps for big B."""
    tb = min(block_b, B)
    if tb < B:
        # (8,128) rule: a non-full-extent block's sublane dim must be /8.
        tb = max(8, (tb // 8) * 8)
    # Keep >= 2 grid steps for large batches so "parallel" shards across
    # v7x's two TensorCores (no effect on v5e/v6e single-TC).
    if B >= _MIN_B_FOR_TC_SPLIT and -(-B // tb) < 2:
        half = -(-B // 2)            # ceil(B/2)
        half = -(-half // 8) * 8     # round up to a multiple of 8
        tb = min(tb, half)
    return tb


@functools.partial(
    jax.jit, static_argnames=("block_b", "vmem_limit_bytes", "x_buffers")
)
def encoder_forward(w_in, prepared, *, block_b=2048, vmem_limit_bytes=None,
                    x_buffers=2):
    """Fused MLP encoder forward.

    w_in:     [B, in_size].  Preferred dtype: bf16 straight from the producer
              (halves the dominant x HBM stream); f32 also accepted.  Do NOT
              add an f32->bf16 cast in a wrapper — it costs an extra HBM
              round trip and erases the saving.
    prepared: output of `prepare_params` (bf16 weights for production).
    block_b:  batch tile.  Default 2048; sweep 2048-4096 (4096-8192 on v7x,
              where HBM is ~2.3x faster so step overhead dominates longer).
              VMEM only becomes a concern at block_b >~ 16-32k f32.
    vmem_limit_bytes: raise (e.g. 32-64 MiB) only on v5e when sweeping
              block_b >= ~8192 with f32 input (16 MiB scoped default there).
    x_buffers: >2 requests deeper pipelining on the x stream; use only if a
              trace shows exposed DMA gaps between grid steps.
    """
    B, in_size = w_in.shape
    h1 = prepared["w1t"].shape[1]
    h2 = prepared["w2t"].shape[1]
    latent = prepared["w3t"].shape[1]

    tb = _pick_batch_tile(B, block_b)
    grid = (pl.cdiv(B, tb),)

    x_spec_kwargs = {}
    if x_buffers is not None and x_buffers > 2:
        x_spec_kwargs["pipeline_mode"] = pl.Buffered(x_buffers)
    x_spec = pl.BlockSpec((tb, in_size), lambda i: (i, 0), **x_spec_kwargs)

    out = pl.pallas_call(
        _encoder_kernel,
        out_shape=jax.ShapeDtypeStruct((B, latent), w_in.dtype),
        grid_spec=pltpu.PrefetchScalarGridSpec(
            num_scalar_prefetch=0,
            grid=grid,
            in_specs=[
                x_spec,                                          # x tile (streams)
                pl.BlockSpec((in_size, h1), lambda i: (0, 0)),   # W1^T (grid-invariant)
                pl.BlockSpec((1, h1), lambda i: (0, 0)),         # b1
                pl.BlockSpec((h1, h2), lambda i: (0, 0)),        # W2^T
                pl.BlockSpec((1, h2), lambda i: (0, 0)),         # b2
                pl.BlockSpec((h2, latent), lambda i: (0, 0)),    # W3^T
                pl.BlockSpec((1, latent), lambda i: (0, 0)),     # b3
            ],
            out_specs=pl.BlockSpec((tb, latent), lambda i: (i, 0)),
        ),
        compiler_params=pltpu.CompilerParams(
            dimension_semantics=("parallel",),
            vmem_limit_bytes=vmem_limit_bytes,
        ),
    )(w_in, prepared["w1t"], prepared["b1"], prepared["w2t"],
      prepared["b2"], prepared["w3t"], prepared["b3"])
    return out


def init_encoder_params(key, in_size, latent_size):
    """Deterministic init matching nn.Linear shapes (out_features, in_features)."""
    h1 = in_size // 2
    h2 = in_size // 4
    k = jax.random.split(key, 6)

    def linear_init(kw, kb, fan_in, fan_out):
        bound = 1.0 / jnp.sqrt(fan_in)
        w = jax.random.uniform(kw, (fan_out, fan_in), jnp.float32, -bound, bound)
        b = jax.random.uniform(kb, (fan_out,), jnp.float32, -bound, bound)
        return w, b

    w1, b1 = linear_init(k[0], k[1], in_size, h1)
    w2, b2 = linear_init(k[2], k[3], h1, h2)
    w3, b3 = linear_init(k[4], k[5], h2, latent_size)
    return {"w1": w1, "b1": b1, "w2": w2, "b2": b2, "w3": w3, "b3": b3}


def encoder_reference(w_in, params):
    """Pure-JAX f32 reference matching the PyTorch forward exactly."""
    out = w_in @ params["w1"].T + params["b1"]
    out = jnp.maximum(out, 0.0)
    out = out @ params["w2"].T + params["b2"]
    out = jnp.maximum(out, 0.0)
    out = out @ params["w3"].T + params["b3"]
    return jnp.maximum(out, 0.0)


if __name__ == "__main__":
    key = jax.random.PRNGKey(0)
    k_param, k_x1, k_x2 = jax.random.split(key, 3)

    in_size = 128          # -> hidden1 = 64, hidden2 = 32
    latent_size = 16
    params = init_encoder_params(k_param, in_size, latent_size)

    # --- Test 1: f32 compute path (parity-test-only), tiny batch, single tile.
    x_small = jax.random.normal(k_x1, (8, in_size), dtype=jnp.float32)
    prepared_f32 = prepare_params(params, compute_dtype=jnp.float32)
    z_f32 = jax.block_until_ready(encoder_forward(x_small, prepared_f32))
    z_ref_small = encoder_reference(x_small, params)
    assert z_f32.shape == (8, latent_size)
    assert jnp.allclose(z_f32, z_ref_small, atol=1e-5, rtol=1e-5), "f32 path mismatch"

    # --- Test 2: production bf16 weights, f32 input, multi-step grid with a
    #             partial final tile (B=200 not divisible by block_b=128).
    x_big = jax.random.normal(k_x2, (200, in_size), dtype=jnp.float32)
    prepared_bf16 = prepare_params(params)   # bf16 default
    z_bf16 = jax.block_until_ready(
        encoder_forward(x_big, prepared_bf16, block_b=128)
    )
    z_ref_big = encoder_reference(x_big, params)
    assert z_bf16.shape == (200, latent_size)
    assert jnp.allclose(z_bf16, z_ref_big, atol=2e-2, rtol=2e-2), "bf16 path mismatch"

    # --- Test 3: preferred caller contract — bf16 input from the producer
    #             (halves the dominant x HBM stream at production batch sizes).
    x_bf16_in = x_big.astype(jnp.bfloat16)
    z_bf16_in = jax.block_until_ready(
        encoder_forward(x_bf16_in, prepared_bf16, block_b=128)
    )
    assert z_bf16_in.shape == (200, latent_size)
    assert jnp.allclose(z_bf16_in.astype(jnp.float32), z_ref_big,
                        atol=5e-2, rtol=5e-2), "bf16-input path mismatch"

    print("KERNEL_OK")
</pallas_src>

<mosaic_0001>
module attributes {stable_mosaic.version = 11 : i64} {
  func.func @_encoder_kernel(%arg0: i32, %arg1: memref<8x128xf32, #tpu.memory_space<vmem>>, %arg2: memref<128x64xf32, #tpu.memory_space<vmem>>, %arg3: memref<1x64xf32, #tpu.memory_space<vmem>>, %arg4: memref<64x32xf32, #tpu.memory_space<vmem>>, %arg5: memref<1x32xf32, #tpu.memory_space<vmem>>, %arg6: memref<32x16xf32, #tpu.memory_space<vmem>>, %arg7: memref<1x16xf32, #tpu.memory_space<vmem>>, %arg8: memref<8x16xf32, #tpu.memory_space<vmem>>) attributes {dimension_semantics = [#tpu.dimension_semantics<parallel>], iteration_bounds = array<i64: 1>, scalar_prefetch = 0 : i64, scratch_operands = 0 : i64, tpu.core_type = #tpu.core_type<tc>, window_params = [{transform_indices = @transform_0, window_bounds = array<i64: 8, 128>}, {pipeline_mode = #tpu.pipeline_mode<synchronous>, transform_indices = @transform_1, window_bounds = array<i64: 128, 64>}, {pipeline_mode = #tpu.pipeline_mode<synchronous>, transform_indices = @transform_2, window_bounds = array<i64: 1, 64>}, {pipeline_mode = #tpu.pipeline_mode<synchronous>, transform_indices = @transform_3, window_bounds = array<i64: 64, 32>}, {pipeline_mode = #tpu.pipeline_mode<synchronous>, transform_indices = @transform_4, window_bounds = array<i64: 1, 32>}, {pipeline_mode = #tpu.pipeline_mode<synchronous>, transform_indices = @transform_5, window_bounds = array<i64: 32, 16>}, {pipeline_mode = #tpu.pipeline_mode<synchronous>, transform_indices = @transform_6, window_bounds = array<i64: 1, 16>}, {transform_indices = @transform_7, window_bounds = array<i64: 8, 16>}]} {
    %c0 = arith.constant 0 : index
    %c0_0 = arith.constant 0 : index
    %0 = vector.load %arg1[%c0, %c0_0] : memref<8x128xf32, #tpu.memory_space<vmem>>, vector<8x128xf32>
    %c0_1 = arith.constant 0 : index
    %c0_2 = arith.constant 0 : index
    %1 = vector.load %arg2[%c0_1, %c0_2] : memref<128x64xf32, #tpu.memory_space<vmem>>, vector<128x64xf32>
    %cst = arith.constant dense<0.000000e+00> : vector<8x64xf32>
    %2 = tpu.matmul %0, %1, %cst {dimension_numbers = #tpu.dot_dimension_numbers<[1], [0], [0], [1], [0, 0, 1, 1], [], []>} : vector<8x128xf32>, vector<128x64xf32>, vector<8x64xf32> -> vector<8x64xf32>
    %c0_3 = arith.constant 0 : index
    %c0_4 = arith.constant 0 : index
    %3 = vector.load %arg3[%c0_3, %c0_4] : memref<1x64xf32, #tpu.memory_space<vmem>>, vector<1x64xf32>
    %4 = vector.broadcast %3 : vector<1x64xf32> to vector<8x64xf32>
    %5 = arith.addf %2, %4 : vector<8x64xf32>
    %cst_5 = arith.constant 0.000000e+00 : f32
    %6 = vector.broadcast %cst_5 : f32 to vector<8x64xf32>
    %7 = arith.maximumf %5, %6 : vector<8x64xf32>
    %c0_6 = arith.constant 0 : index
    %c0_7 = arith.constant 0 : index
    %8 = vector.load %arg4[%c0_6, %c0_7] : memref<64x32xf32, #tpu.memory_space<vmem>>, vector<64x32xf32>
    %cst_8 = arith.constant dense<0.000000e+00> : vector<8x32xf32>
    %9 = tpu.matmul %7, %8, %cst_8 {dimension_numbers = #tpu.dot_dimension_numbers<[1], [0], [0], [1], [0, 0, 1, 1], [], []>} : vector<8x64xf32>, vector<64x32xf32>, vector<8x32xf32> -> vector<8x32xf32>
    %c0_9 = arith.constant 0 : index
    %c0_10 = arith.constant 0 : index
    %10 = vector.load %arg5[%c0_9, %c0_10] : memref<1x32xf32, #tpu.memory_space<vmem>>, vector<1x32xf32>
    %11 = vector.broadcast %10 : vector<1x32xf32> to vector<8x32xf32>
    %12 = arith.addf %9, %11 : vector<8x32xf32>
    %cst_11 = arith.constant 0.000000e+00 : f32
    %13 = vector.broadcast %cst_11 : f32 to vector<8x32xf32>
    %14 = arith.maximumf %12, %13 : vector<8x32xf32>
    %c0_12 = arith.constant 0 : index
    %c0_13 = arith.constant 0 : index
    %15 = vector.load %arg6[%c0_12, %c0_13] : memref<32x16xf32, #tpu.memory_space<vmem>>, vector<32x16xf32>
    %cst_14 = arith.constant dense<0.000000e+00> : vector<8x16xf32>
    %16 = tpu.matmul %14, %15, %cst_14 {dimension_numbers = #tpu.dot_dimension_numbers<[1], [0], [0], [1], [0, 0, 1, 1], [], []>} : vector<8x32xf32>, vector<32x16xf32>, vector<8x16xf32> -> vector<8x16xf32>
    %c0_15 = arith.constant 0 : index
    %c0_16 = arith.constant 0 : index
    %17 = vector.load %arg7[%c0_15, %c0_16] : memref<1x16xf32, #tpu.memory_space<vmem>>, vector<1x16xf32>
    %18 = vector.broadcast %17 : vector<1x16xf32> to vector<8x16xf32>
    %19 = arith.addf %16, %18 : vector<8x16xf32>
    %cst_17 = arith.constant 0.000000e+00 : f32
    %20 = vector.broadcast %cst_17 : f32 to vector<8x16xf32>
    %21 = arith.maximumf %19, %20 : vector<8x16xf32>
    %c0_18 = arith.constant 0 : index
    %c0_19 = arith.constant 0 : index
    %22 = vector.load %arg8[%c0_18, %c0_19] : memref<8x16xf32, #tpu.memory_space<vmem>>, vector<8x16xf32>
    tpu.vector_store %arg8[%c0_18, %c0_19], %21 {strides = array<i32>} : memref<8x16xf32, #tpu.memory_space<vmem>>, vector<8x16xf32>,
    return
  }
  func.func @transform_0(%arg0: i32) -> (i32, i32) {
    %c0_i32 = arith.constant 0 : i32
    %c0_i32_0 = arith.constant 0 : i32
    return %arg0, %c0_i32 : i32, i32
  }
  func.func @transform_1(%arg0: i32) -> (i32, i32) {
    %c0_i32 = arith.constant 0 : i32
    %c0_i32_0 = arith.constant 0 : i32
    %c0_i32_1 = arith.constant 0 : i32
    return %c0_i32, %c0_i32_0 : i32, i32
  }
  func.func @transform_2(%arg0: i32) -> (i32, i32) {
    %c0_i32 = arith.constant 0 : i32
    %c0_i32_0 = arith.constant 0 : i32
    %c0_i32_1 = arith.constant 0 : i32
    return %c0_i32, %c0_i32_0 : i32, i32
  }
  func.func @transform_3(%arg0: i32) -> (i32, i32) {
    %c0_i32 = arith.constant 0 : i32
    %c0_i32_0 = arith.constant 0 : i32
    %c0_i32_1 = arith.constant 0 : i32
    return %c0_i32, %c0_i32_0 : i32, i32
  }
  func.func @transform_4(%arg0: i32) -> (i32, i32) {
    %c0_i32 = arith.constant 0 : i32
    %c0_i32_0 = arith.constant 0 : i32
    %c0_i32_1 = arith.constant 0 : i32
    return %c0_i32, %c0_i32_0 : i32, i32
  }
  func.func @transform_5(%arg0: i32) -> (i32, i32) {
    %c0_i32 = arith.constant 0 : i32
    %c0_i32_0 = arith.constant 0 : i32
    %c0_i32_1 = arith.constant 0 : i32
    return %c0_i32, %c0_i32_0 : i32, i32
  }
  func.func @transform_6(%arg0: i32) -> (i32, i32) {
    %c0_i32 = arith.constant 0 : i32
    %c0_i32_0 = arith.constant 0 : i32
    %c0_i32_1 = arith.constant 0 : i32
    return %c0_i32, %c0_i32_0 : i32, i32
  }
  func.func @transform_7(%arg0: i32) -> (i32, i32) {
    %c0_i32 = arith.constant 0 : i32
    %c0_i32_0 = arith.constant 0 : i32
    return %arg0, %c0_i32 : i32, i32
  }
}

</mosaic_0001>

<llo_original>
// kernel: encoder_forward.1
$region0: #{encoder_forward.1}
  #allocation0 [shape = 'u32[]', space=smem, size = 0x4, offset = 0x4, fixed_abs, tag = 'smem constant byte address 0x4 - core index']
  #allocation1 [shape = 'u32[72,128]{1,0:T(1,128)}', space=vmem, size = 0x9000, scoped, tag = 'internal scratch']
  %s0 = inlined_call_operand.vmem [shape: f32[8,128], index: 0, kind: input, shape index: {}]
  %s1 = inlined_call_operand.vmem [shape: f32[128,64], index: 1, kind: input, shape index: {}]
  %s2 = inlined_call_operand.vmem [shape: f32[1,64], index: 2, kind: input, shape index: {}]
  %s3 = inlined_call_operand.vmem [shape: f32[64,32], index: 3, kind: input, shape index: {}]
  %s4 = inlined_call_operand.vmem [shape: f32[1,32], index: 4, kind: input, shape index: {}]
  %s5 = inlined_call_operand.vmem [shape: f32[32,16], index: 5, kind: input, shape index: {}]
  %s6 = inlined_call_operand.vmem [shape: f32[1,16], index: 6, kind: input, shape index: {}]
  %s7 = inlined_call_operand.hbm [shape: f32[8,16], index: 7, kind: output, shape index: {}]
  %s8 = sld [smem:[#allocation0]]
  $region38: #{encoder_forward.1} parent=0
    _
  %s10 = ssub.s32 1, %s8
  %s11 = scalar_select 0, %s10, %s8
  $region1: #{encoder_forward.1} parent=0
    #allocation2 [shape = 'u8[4096]{0}', space=vmem, size = 0x1000, scoped, tag = 'output window, operand 0, single buffered']
    #allocation3 [shape = 's32[1]{0}', space=sflag, size = 0x4, scoped, tag = 'scoped memory for encoder_forward.1']
    %12 = vsyncpa [#allocation3], 0
    // Predicated region
    $region2: #{encoder_forward.1} parent=1 // pred_check
      _
    $region3: #{encoder_forward.1} parent=1 // pred_check_branch
      %14 = sbr.rel (0) target = $region5
    $region4: #{encoder_forward.1} parent=1 // pred_region
      _
    $region5: #{encoder_forward.1} parent=1 // pred_fallthru
      _
    // Predicated region
    $region6: #{encoder_forward.1} parent=1 // pred_check
      _
    $region7: #{encoder_forward.1} parent=1 // pred_check_branch
      %16 = sbr.rel (0) target = $region9
    $region8: #{encoder_forward.1} parent=1 // pred_region
      _
    $region9: #{encoder_forward.1} parent=1 // pred_fallthru
      _
    // Predicated region
    $region10: #{encoder_forward.1} parent=1 // pred_check
      _
    $region11: #{encoder_forward.1} parent=1 // pred_check_branch
      %18 = sbr.rel (0) target = $region13
    $region12: #{encoder_forward.1} parent=1 // pred_region
      _
    $region13: #{encoder_forward.1} parent=1 // pred_fallthru
      _
    // Predicated region
    $region14: #{encoder_forward.1} parent=1 // pred_check
      _
    $region15: #{encoder_forward.1} parent=1 // pred_check_branch
      %20 = sbr.rel (0) target = $region17
    $region16: #{encoder_forward.1} parent=1 // pred_region
      _
    $region17: #{encoder_forward.1} parent=1 // pred_fallthru
      _
    // Predicated region
    $region18: #{encoder_forward.1} parent=1 // pred_check
      _
    $region19: #{encoder_forward.1} parent=1 // pred_check_branch
      %22 = sbr.rel (0) target = $region21
    $region20: #{encoder_forward.1} parent=1 // pred_region
      _
    $region21: #{encoder_forward.1} parent=1 // pred_fallthru
      _
    // Predicated region
    $region22: #{encoder_forward.1} parent=1 // pred_check
      _
    $region23: #{encoder_forward.1} parent=1 // pred_check_branch
      %24 = sbr.rel (0) target = $region25
    $region24: #{encoder_forward.1} parent=1 // pred_region
      _
    $region25: #{encoder_forward.1} parent=1 // pred_fallthru
      _
    // Predicated region
    $region26: #{encoder_forward.1} parent=1 // pred_check
      _
    $region27: #{encoder_forward.1} parent=1 // pred_check_branch
      %26 = sbr.rel (0) target = $region29
    $region28: #{encoder_forward.1} parent=1 // pred_region
      _
    $region29: #{encoder_forward.1} parent=1 // pred_fallthru
      _
    %v27 = vld [vmem:[%s0] sm:$0xff]
    %v28 = vld [vmem:[%s1] sm:$0xff]
    %v29 = vld [vmem:[%s1 + $0x8] sm:$0xff]
    %v30 = vld [vmem:[%s1 + $0x10] sm:$0xff]
    %v31 = vld [vmem:[%s1 + $0x18] sm:$0xff]
    %v32 = vld [vmem:[%s1 + $0x20] sm:$0xff]
    %v33 = vld [vmem:[%s1 + $0x28] sm:$0xff]
    %v34 = vld [vmem:[%s1 + $0x30] sm:$0xff]
    %v35 = vld [vmem:[%s1 + $0x38] sm:$0xff]
    %v36 = vld [vmem:[%s1 + $0x40] sm:$0xff]
    %v37 = vld [vmem:[%s1 + $0x48] sm:$0xff]
    %v38 = vld [vmem:[%s1 + $0x50] sm:$0xff]
    %v39 = vld [vmem:[%s1 + $0x58] sm:$0xff]
    %v40 = vld [vmem:[%s1 + $0x60] sm:$0xff]
    %v41 = vld [vmem:[%s1 + $0x68] sm:$0xff]
    %v42 = vld [vmem:[%s1 + $0x70] sm:$0xff]
    %v43 = vld [vmem:[%s1 + $0x78] sm:$0xff]
    %v44 = vld [vmem:[%s2] sm:$0x1]
    %v46 = vperm.slane %v44, 0
    %48 = vmatpush.msra.mxu0 %v43
    %49 = vmatpush.msra.mxu0 %v42
    %50 = vmatpush.msra.mxu0 %v41
    %51 = vmatpush.msra.mxu0 %v40
    %52 = vmatpush.msra.mxu0 %v39
    %53 = vmatpush.msra.mxu0 %v38
    %54 = vmatpush.msra.mxu0 %v37
    %55 = vmatpush.msra.mxu0 %v36
    %56 = vmatpush.msra.mxu0 %v35
    %57 = vmatpush.msra.mxu0 %v34
    %58 = vmatpush.msra.mxu0 %v33
    %59 = vmatpush.msra.mxu0 %v32
    %60 = vmatpush.msra.mxu0 %v31
    %61 = vmatpush.msra.mxu0 %v30
    %62 = vmatpush.msra.mxu0 %v29
    %63 = vmatpush.msra.mxu0 %v28
    %64 = vmatmul.f32.gmra.mxu0 %v27
    %v65 = vpop.f32.mrf.mxu0
    %v66 = vadd.f32 %v46, %v65
    %67 = vdwg.mxu0
    %v68 = vmax.f32 %v66, 0.0
    %v69 = vld [vmem:[%s3] sm:$0xff]
    %v70 = vld [vmem:[%s3 + $0x8] sm:$0xff]
    %v71 = vld [vmem:[%s3 + $0x10] sm:$0xff]
    %v72 = vld [vmem:[%s3 + $0x18] sm:$0xff]
    %v73 = vld [vmem:[%s3 + $0x20] sm:$0xff]
    %v74 = vld [vmem:[%s3 + $0x28] sm:$0xff]
    %v75 = vld [vmem:[%s3 + $0x30] sm:$0xff]
    %v76 = vld [vmem:[%s3 + $0x38] sm:$0xff]
    %v77 = vld [vmem:[%s4] sm:$0x1]
    %v79 = vperm.slane %v77, 0
    %vm81 = vcmask 523264
    %v83 = vsel %vm81, %v68, 0
    %85 = vmatpush.msra.mxu0 0.0
    %86 = vmatpush.msra.mxu0 0.0
    %87 = vmatpush.msra.mxu0 0.0
    %88 = vmatpush.msra.mxu0 0.0
    %89 = vmatpush.msra.mxu0 0.0
    %90 = vmatpush.msra.mxu0 0.0
    %91 = vmatpush.msra.mxu0 0.0
    %92 = vmatpush.msra.mxu0 0.0
    %93 = vmatpush.msra.mxu0 %v76
    %94 = vmatpush.msra.mxu0 %v75
    %95 = vmatpush.msra.mxu0 %v74
    %96 = vmatpush.msra.mxu0 %v73
    %97 = vmatpush.msra.mxu0 %v72
    %98 = vmatpush.msra.mxu0 %v71
    %99 = vmatpush.msra.mxu0 %v70
    %100 = vmatpush.msra.mxu0 %v69
    %101 = vmatmul.f32.gmra.mxu0 %v83
    %v102 = vpop.f32.mrf.mxu0
    %v103 = vadd.f32 %v79, %v102
    %104 = vdwg.mxu0
    %v105 = vmax.f32 %v103, 0.0
    %v106 = vld [vmem:[%s5] sm:$0xff]
    %v107 = vld [vmem:[%s5 + $0x8] sm:$0xff]
    %v108 = vld [vmem:[%s5 + $0x10] sm:$0xff]
    %v109 = vld [vmem:[%s5 + $0x18] sm:$0xff]
    %v110 = vld [vmem:[%s6] sm:$0x1]
    %v112 = vperm.slane %v110, 0
    %vm114 = vcmask 261120
    %v116 = vsel %vm114, %v105, 0
    %118 = vmatpush.msra.mxu0 0.0
    %119 = vmatpush.msra.mxu0 0.0
    %120 = vmatpush.msra.mxu0 0.0
    %121 = vmatpush.msra.mxu0 0.0
    %122 = vmatpush.msra.mxu0 0.0
    %123 = vmatpush.msra.mxu0 0.0
    %124 = vmatpush.msra.mxu0 0.0
    %125 = vmatpush.msra.mxu0 0.0
    %126 = vmatpush.msra.mxu0 0.0
    %127 = vmatpush.msra.mxu0 0.0
    %128 = vmatpush.msra.mxu0 0.0
    %129 = vmatpush.msra.mxu0 0.0
    %130 = vmatpush.msra.mxu0 %v109
    %131 = vmatpush.msra.mxu0 %v108
    %132 = vmatpush.msra.mxu0 %v107
    %133 = vmatpush.msra.mxu0 %v106
    %134 = vmatmul.f32.gmra.mxu0 %v116
    %v135 = vpop.f32.mrf.mxu0
    %v136 = vadd.f32 %v112, %v135
    %137 = vdwg.mxu0
    %v138 = vmax.f32 %v136, 0.0
    %vm139 = vcmask 130048
    %140 = vst.msk [vmem:[#allocation2] sm:$0xff] %vm139, %v138
    // Predicated region
    $region30: #{encoder_forward.1} parent=1 // pred_check
      _
    $region31: #{encoder_forward.1} parent=1 // pred_check_branch
      %142 = sbr.rel (0) target = $region33
    $region32: #{encoder_forward.1} parent=1 // pred_region
      %144 = vsyncadd [#allocation3], 0
      %s146 = sshll.u32 [#allocation2], 4
      %s147 = int_to_ptr.vmem [resolvable:$true] %s146
      %s148 = sshll.u32 %s7, 4
      %s149 = int_to_ptr.hbm [resolvable:$true] %s148
      %151 = dma.vmem_to_hbm [thread:$0]  %s147, 128, %s149, [#allocation3]
    $region33: #{encoder_forward.1} parent=1 // pred_fallthru
      _
    // Predicated region
    $region34: #{encoder_forward.1} parent=1 // pred_check
      _
    $region35: #{encoder_forward.1} parent=1 // pred_check_branch
      %153 = sbr.rel (0) target = $region37
    $region36: #{encoder_forward.1} parent=1 // pred_region
      %155 = dma.done [#allocation3], 128
    $region37: #{encoder_forward.1} parent=1 // pred_fallthru
      _
    %156 = vsyncpa [#allocation3], 1

</llo_original>
